<compile_context>
chip_gen: v7x
topology: tpu7x:2x2x1
jax: 0.10.0
libtpu: 0.0.40
codegen_flags: <defaults>
</compile_context>

<pallas_src>
import math
from functools import partial

import jax
import jax.numpy as jnp
from jax.experimental import pallas as pl
from jax.experimental.pallas import tpu as pltpu


# ---------------------------------------------------------------------------
# Parameter setup (mirrors VisionRotaryEmbedding.__init__, freqs_for='lang')
# ---------------------------------------------------------------------------
def build_vision_rope_freqs(dim, pt_seq_len, ft_seq_len=None, theta=10000.0):
    if ft_seq_len is None:
        ft_seq_len = pt_seq_len
    freqs = 1.0 / (
        theta ** (jnp.arange(0, dim, 2)[: dim // 2].astype(jnp.float32) / dim)
    )
    t = jnp.arange(ft_seq_len, dtype=jnp.float32) / ft_seq_len * pt_seq_len
    f = t[:, None] * freqs[None, :]            # (ft, dim//2)
    f = jnp.repeat(f, 2, axis=-1)              # '... n -> ... (n r)', r=2 -> (ft, dim)
    f_h = jnp.broadcast_to(f[:, None, :], (ft_seq_len, ft_seq_len, f.shape[-1]))
    f_w = jnp.broadcast_to(f[None, :, :], (ft_seq_len, ft_seq_len, f.shape[-1]))
    freqs_hw = jnp.concatenate([f_h, f_w], axis=-1)
    return jnp.cos(freqs_hw), jnp.sin(freqs_hw)   # each (ft, ft, 2*dim), f32


# ---------------------------------------------------------------------------
# Fused tables: cos padded with 1s, sin split by pair-parity (with sign) and
# padded with 0s over the non-rotated channels.  All f32, flattened to (1, C).
# Built once per (feat_dim, start_index) and cached on the module object.
# ---------------------------------------------------------------------------
def _build_fused_tables(freqs_cos, freqs_sin, feat_dim, start_index):
    H, W, rot_dim = freqs_cos.shape
    end_index = start_index + rot_dim
    cos32 = freqs_cos.astype(jnp.float32)
    sin32 = freqs_sin.astype(jnp.float32)

    j = jnp.arange(rot_dim)
    sa = jnp.where((j % 2) == 0, -sin32, 0.0)   # even lane: -sin -> pairs with x[l+1]
    sb = jnp.where((j % 2) == 1, sin32, 0.0)    # odd  lane: +sin -> pairs with x[l-1]

    cos_full = jnp.ones((H, W, feat_dim), jnp.float32)
    cos_full = cos_full.at[..., start_index:end_index].set(cos32)
    sina_full = jnp.zeros((H, W, feat_dim), jnp.float32)
    sina_full = sina_full.at[..., start_index:end_index].set(sa)
    sinb_full = jnp.zeros((H, W, feat_dim), jnp.float32)
    sinb_full = sinb_full.at[..., start_index:end_index].set(sb)

    C = H * W * feat_dim
    return (cos_full.reshape(1, C),
            sina_full.reshape(1, C),
            sinb_full.reshape(1, C))


# ---------------------------------------------------------------------------
# Pallas kernel: out = x*cos + roll_left(x)*sinA + roll_right(x)*sinB
# ---------------------------------------------------------------------------
def _rope_kernel(t_ref, cos_ref, sina_ref, sinb_ref, o_ref):
    x = t_ref[...].astype(cos_ref.dtype)        # compute in table dtype (f32)
    c = cos_ref[...]                            # (1, C), sublane-broadcast
    sa = sina_ref[...]
    sb = sinb_ref[...]
    C = x.shape[-1]
    # pltpu.roll requires non-negative shift; roll by C-1 == shift-left-by-1.
    x_next = pltpu.roll(x, C - 1, axis=1)       # x_next[l] = x[l+1]
    x_prev = pltpu.roll(x, 1, axis=1)           # x_prev[l] = x[l-1]
    o_ref[...] = (x * c + x_next * sa + x_prev * sb).astype(o_ref.dtype)


# ---------------------------------------------------------------------------
# Per-generation tiling configuration
# ---------------------------------------------------------------------------
def _round_up(x, m):
    return ((x + m - 1) // m) * m


def _chip_tiling_config():
    try:
        kind = jax.devices()[0].device_kind.lower()
    except Exception:
        kind = ""
    if "v7" in kind:
        # 3.2 TB/s HBM, 2 TCs/chip, only 64 MiB physical VMEM:
        # fat blocks + always >= 2 grid steps so both cores get work.
        return dict(target_block_bytes=6 << 20, vmem_budget=40 << 20, split_grid=True)
    if "v6" in kind:
        # 1.3-1.4 TB/s HBM, 128 MiB VMEM: ~4 MiB blocks amortize step overhead.
        return dict(target_block_bytes=4 << 20, vmem_budget=48 << 20, split_grid=False)
    # v5e (and unknown chips): ~0.82 TB/s HBM; 2-3 MiB blocks already hide the
    # ~0.35 us per-step overhead, keep VMEM use modest.
    return dict(target_block_bytes=int(2.5 * (1 << 20)), vmem_budget=24 << 20,
                split_grid=False)


def _plan_rows(N, C, itemsize, table_bytes):
    cfg = _chip_tiling_config()
    sub = max(8, 32 // itemsize)          # f32: 8, bf16: 16, int8/fp8: 32 sublanes
    row_bytes = C * itemsize
    # VMEM for data: 2x double-buffer x (input + output) = 4 block copies.
    budget_block = max(sub * row_bytes, (cfg["vmem_budget"] - table_bytes) // 4)
    # TODO(synk): if even sub*row_bytes exceeds the budget (very wide C = H*W*D),
    # switch to a 2-D (rows, H) grid with (tn, W*feat_dim) blocks to decouple
    # block bytes from C while keeping lane-dense stores.
    block_bytes = min(cfg["target_block_bytes"], budget_block)
    rows = max(sub, (block_bytes // max(1, row_bytes)) // sub * sub)
    if rows < N:
        return rows
    # Everything fits in one block.  On v7x prefer >= 2 grid steps (2 TensorCores).
    if cfg["split_grid"] and N >= 2 * sub:
        half = _round_up((N + 1) // 2, sub)
        if half < N:
            return half
    return N


# ---------------------------------------------------------------------------
# pallas_call wrapper (no pad / slice: grid = cdiv, boundary block is clipped)
# ---------------------------------------------------------------------------
def _rope_pallas(t_flat, cos_f, sina_f, sinb_f, rows_override=None):
    N, C = t_flat.shape
    itemsize = t_flat.dtype.itemsize
    table_itemsize = cos_f.dtype.itemsize
    # 3 tables, double-buffered, (1,C) blocks pad to 8 sublanes in VMEM.
    table_bytes = 3 * 2 * 8 * C * table_itemsize

    if rows_override is not None:
        tn = min(int(rows_override), N)
    else:
        tn = _plan_rows(N, C, itemsize, table_bytes)
    grid_n = pl.cdiv(N, tn)

    needed = 4 * tn * C * itemsize + table_bytes + (4 << 20)   # + scratch margin
    vmem_limit = int(min(max(needed, 32 << 20), 96 << 20))

    return pl.pallas_call(
        _rope_kernel,
        out_shape=jax.ShapeDtypeStruct((N, C), t_flat.dtype),
        grid=(grid_n,),
        in_specs=[
            pl.BlockSpec((tn, C), lambda n: (n, 0)),
            pl.BlockSpec((1, C), lambda n: (0, 0)),   # tables stay VMEM-resident
            pl.BlockSpec((1, C), lambda n: (0, 0)),
            pl.BlockSpec((1, C), lambda n: (0, 0)),
        ],
        out_specs=pl.BlockSpec((tn, C), lambda n: (n, 0)),
        compiler_params=pltpu.CompilerParams(
            dimension_semantics=("parallel",),
            vmem_limit_bytes=vmem_limit),
        cost_estimate=pl.CostEstimate(
            flops=5 * N * C,
            transcendentals=0,
            bytes_accessed=2 * N * C * itemsize + 3 * C * table_itemsize),
    )(t_flat, cos_f, sina_f, sinb_f)


@partial(jax.jit, static_argnames=("rows_override",))
def _rope_forward(t, cos_f, sina_f, sinb_f, *, rows_override=None):
    C = cos_f.shape[-1]
    lead = t.shape[:-3]
    N = int(math.prod(lead)) if lead else 1
    t_flat = t.reshape(N, C)
    out = _rope_pallas(t_flat, cos_f, sina_f, sinb_f, rows_override=rows_override)
    return out.reshape(t.shape)


# ---------------------------------------------------------------------------
# Module-like wrapper (mirrors the PyTorch nn.Module __init__ / forward split)
# ---------------------------------------------------------------------------
class VisionRotaryEmbedding:
    def __init__(self, dim, pt_seq_len, ft_seq_len=None, theta=10000.0):
        self.freqs_cos, self.freqs_sin = build_vision_rope_freqs(
            dim, pt_seq_len, ft_seq_len, theta)
        print("======== shape of rope freq", self.freqs_cos.shape, "========")
        self._table_cache = {}   # (feat_dim, start_index) -> fused tables

    def _tables(self, feat_dim, start_index):
        key = (int(feat_dim), int(start_index))
        if key not in self._table_cache:
            self._table_cache[key] = _build_fused_tables(
                self.freqs_cos, self.freqs_sin, feat_dim, start_index)
        return self._table_cache[key]

    def __call__(self, t, start_index=0, *, rows_override=None):
        H, W, rot_dim = self.freqs_cos.shape
        feat_dim = t.shape[-1]
        end_index = start_index + rot_dim
        assert rot_dim <= feat_dim, (
            f"feature dimension {feat_dim} is not of sufficient size to rotate "
            f"in all the positions {rot_dim}")
        assert end_index <= feat_dim
        assert t.shape[-3] == H and t.shape[-2] == W
        cos_f, sina_f, sinb_f = self._tables(feat_dim, start_index)
        return _rope_forward(t, cos_f, sina_f, sinb_f, rows_override=rows_override)


# ---------------------------------------------------------------------------
# Pure-JAX reference (matches the PyTorch semantics) for validation
# ---------------------------------------------------------------------------
def _rotate_half_ref(x):
    xr = x.reshape(x.shape[:-1] + (x.shape[-1] // 2, 2))
    x1, x2 = xr[..., 0], xr[..., 1]
    return jnp.stack((-x2, x1), axis=-1).reshape(x.shape)


def _ref_forward(t, freqs_cos, freqs_sin, start_index=0):
    rot_dim = freqs_cos.shape[-1]
    end_index = start_index + rot_dim
    t_left = t[..., :start_index]
    t_mid = t[..., start_index:end_index]
    t_right = t[..., end_index:]
    t_mid = t_mid * freqs_cos + _rotate_half_ref(t_mid) * freqs_sin
    return jnp.concatenate([t_left, t_mid, t_right], axis=-1)


if __name__ == "__main__":
    # VisionRotaryEmbedding(dim=16, pt_seq_len=4) -> freqs_{cos,sin}: (4, 4, 32)
    rope = VisionRotaryEmbedding(dim=16, pt_seq_len=4)

    # input: (batch, heads, H, W, head_dim); head_dim > rot_dim exercises the
    # fused passthrough channels.  C = 4*4*64 = 1024 lanes per row.
    key = jax.random.PRNGKey(0)
    t = jax.random.normal(key, (2, 3, 4, 4, 64), dtype=jnp.float32)

    # Case 1: start_index = 0 (right-side passthrough)
    out = jax.block_until_ready(rope(t, start_index=0))
    ref = _ref_forward(t, rope.freqs_cos, rope.freqs_sin, start_index=0)
    assert out.shape == t.shape and out.dtype == t.dtype
    err = float(jnp.max(jnp.abs(out - ref)))
    assert err < 1e-5, f"mismatch vs reference (start=0): {err}"

    # Case 2: start_index = 16 (passthrough on both sides)
    out2 = jax.block_until_ready(rope(t, start_index=16))
    ref2 = _ref_forward(t, rope.freqs_cos, rope.freqs_sin, start_index=16)
    err2 = float(jnp.max(jnp.abs(out2 - ref2)))
    assert err2 < 1e-5, f"mismatch vs reference (start=16): {err2}"

    # Case 3: leading dim not divisible by the tile -> boundary block clipped by
    # the grid (no pad / slice round trips).
    t3 = jax.random.normal(jax.random.PRNGKey(1), (10, 4, 4, 64), dtype=jnp.float32)
    out3 = jax.block_until_ready(rope(t3, start_index=0, rows_override=8))
    ref3 = _ref_forward(t3, rope.freqs_cos, rope.freqs_sin, start_index=0)
    err3 = float(jnp.max(jnp.abs(out3 - ref3)))
    assert err3 < 1e-5, f"mismatch vs reference (remainder block): {err3}"

    # Case 4: bf16 I/O (f32 compute in-kernel) -> halves HBM traffic.
    t4 = t.astype(jnp.bfloat16)
    out4 = jax.block_until_ready(rope(t4, start_index=0))
    assert out4.dtype == jnp.bfloat16 and out4.shape == t4.shape
    ref4 = _ref_forward(t4.astype(jnp.float32), rope.freqs_cos, rope.freqs_sin, 0)
    err4 = float(jnp.max(jnp.abs(out4.astype(jnp.float32) - ref4)))
    assert err4 < 5e-2, f"mismatch vs reference (bf16): {err4}"

    # Steady state: cached tables + cached jit executable -> one kernel launch.
    _ = jax.block_until_ready(rope(t, start_index=0))

    print("KERNEL_OK")
</pallas_src>

<mosaic_0001>
module attributes {stable_mosaic.version = 11 : i64} {
  func.func @_rope_kernel(%arg0: i32, %arg1: memref<6x1024xf32, #tpu.memory_space<vmem>>, %arg2: memref<1x1024xf32, #tpu.memory_space<vmem>>, %arg3: memref<1x1024xf32, #tpu.memory_space<vmem>>, %arg4: memref<1x1024xf32, #tpu.memory_space<vmem>>, %arg5: memref<6x1024xf32, #tpu.memory_space<vmem>>) attributes {dimension_semantics = [#tpu.dimension_semantics<parallel>], iteration_bounds = array<i64: 1>, scalar_prefetch = 0 : i64, scratch_operands = 0 : i64, tpu.core_type = #tpu.core_type<tc>, window_params = [{transform_indices = @transform_0, window_bounds = array<i64: 6, 1024>}, {pipeline_mode = #tpu.pipeline_mode<synchronous>, transform_indices = @transform_1, window_bounds = array<i64: 1, 1024>}, {pipeline_mode = #tpu.pipeline_mode<synchronous>, transform_indices = @transform_2, window_bounds = array<i64: 1, 1024>}, {pipeline_mode = #tpu.pipeline_mode<synchronous>, transform_indices = @transform_3, window_bounds = array<i64: 1, 1024>}, {transform_indices = @transform_4, window_bounds = array<i64: 6, 1024>}]} {
    %c0 = arith.constant 0 : index
    %c0_0 = arith.constant 0 : index
    %0 = vector.load %arg1[%c0, %c0_0] : memref<6x1024xf32, #tpu.memory_space<vmem>>, vector<6x1024xf32>
    %c0_1 = arith.constant 0 : index
    %c0_2 = arith.constant 0 : index
    %1 = vector.load %arg2[%c0_1, %c0_2] : memref<1x1024xf32, #tpu.memory_space<vmem>>, vector<1x1024xf32>
    %c0_3 = arith.constant 0 : index
    %c0_4 = arith.constant 0 : index
    %2 = vector.load %arg3[%c0_3, %c0_4] : memref<1x1024xf32, #tpu.memory_space<vmem>>, vector<1x1024xf32>
    %c0_5 = arith.constant 0 : index
    %c0_6 = arith.constant 0 : index
    %3 = vector.load %arg4[%c0_5, %c0_6] : memref<1x1024xf32, #tpu.memory_space<vmem>>, vector<1x1024xf32>
    %c1023_i32 = arith.constant 1023 : i32
    %4 = tpu.dynamic_rotate %0 by %c1023_i32 dim 1 : vector<6x1024xf32>, i32 -> vector<6x1024xf32>
    %c1_i32 = arith.constant 1 : i32
    %5 = tpu.dynamic_rotate %0 by %c1_i32 dim 1 : vector<6x1024xf32>, i32 -> vector<6x1024xf32>
    %6 = vector.broadcast %1 : vector<1x1024xf32> to vector<6x1024xf32>
    %7 = arith.mulf %0, %6 : vector<6x1024xf32>
    %8 = vector.broadcast %2 : vector<1x1024xf32> to vector<6x1024xf32>
    %9 = arith.mulf %4, %8 : vector<6x1024xf32>
    %10 = arith.addf %7, %9 : vector<6x1024xf32>
    %11 = vector.broadcast %3 : vector<1x1024xf32> to vector<6x1024xf32>
    %12 = arith.mulf %5, %11 : vector<6x1024xf32>
    %13 = arith.addf %10, %12 : vector<6x1024xf32>
    %c0_7 = arith.constant 0 : index
    %c0_8 = arith.constant 0 : index
    %14 = vector.load %arg5[%c0_7, %c0_8] : memref<6x1024xf32, #tpu.memory_space<vmem>>, vector<6x1024xf32>
    tpu.vector_store %arg5[%c0_7, %c0_8], %13 {strides = array<i32>} : memref<6x1024xf32, #tpu.memory_space<vmem>>, vector<6x1024xf32>,
    return
  }
  func.func @transform_0(%arg0: i32) -> (i32, i32) {
    %c0_i32 = arith.constant 0 : i32
    %c0_i32_0 = arith.constant 0 : i32
    return %arg0, %c0_i32 : i32, i32
  }
  func.func @transform_1(%arg0: i32) -> (i32, i32) {
    %c0_i32 = arith.constant 0 : i32
    %c0_i32_0 = arith.constant 0 : i32
    %c0_i32_1 = arith.constant 0 : i32
    return %c0_i32, %c0_i32_0 : i32, i32
  }
  func.func @transform_2(%arg0: i32) -> (i32, i32) {
    %c0_i32 = arith.constant 0 : i32
    %c0_i32_0 = arith.constant 0 : i32
    %c0_i32_1 = arith.constant 0 : i32
    return %c0_i32, %c0_i32_0 : i32, i32
  }
  func.func @transform_3(%arg0: i32) -> (i32, i32) {
    %c0_i32 = arith.constant 0 : i32
    %c0_i32_0 = arith.constant 0 : i32
    %c0_i32_1 = arith.constant 0 : i32
    return %c0_i32, %c0_i32_0 : i32, i32
  }
  func.func @transform_4(%arg0: i32) -> (i32, i32) {
    %c0_i32 = arith.constant 0 : i32
    %c0_i32_0 = arith.constant 0 : i32
    return %arg0, %c0_i32 : i32, i32
  }
}

</mosaic_0001>

<llo_original>
// kernel: _rope_forward.1
$region0: #{_rope_forward.1}
  #allocation0 [shape = 'u32[]', space=smem, size = 0x4, offset = 0x4, fixed_abs, tag = 'smem constant byte address 0x4 - core index']
  #allocation1 [shape = 'u32[144,128]{1,0:T(1,128)}', space=vmem, size = 0x12000, scoped, tag = 'internal scratch']
  %s0 = inlined_call_operand.vmem [shape: f32[6,1024], index: 0, kind: input, shape index: {}]
  %s1 = inlined_call_operand.vmem [shape: f32[1,1024], index: 1, kind: input, shape index: {}]
  %s2 = inlined_call_operand.vmem [shape: f32[1,1024], index: 2, kind: input, shape index: {}]
  %s3 = inlined_call_operand.vmem [shape: f32[1,1024], index: 3, kind: input, shape index: {}]
  %s4 = inlined_call_operand.vmem [shape: f32[6,1024], index: 4, kind: output, shape index: {}]
  %s5 = sld [smem:[#allocation0]]
  $region26: #{_rope_forward.1} parent=0
    _
  %s7 = ssub.s32 1, %s5
  %s8 = scalar_select 0, %s7, %s5
  // Predicated region
  $region2: #{_rope_forward.1} parent=0 // pred_check
    _
  $region3: #{_rope_forward.1} parent=0 // pred_check_branch
    %10 = sbr.rel (0) target = $region5
  $region4: #{_rope_forward.1} parent=0 // pred_region
    _
  $region5: #{_rope_forward.1} parent=0 // pred_fallthru
    _
  // Predicated region
  $region6: #{_rope_forward.1} parent=0 // pred_check
    _
  $region7: #{_rope_forward.1} parent=0 // pred_check_branch
    %12 = sbr.rel (0) target = $region9
  $region8: #{_rope_forward.1} parent=0 // pred_region
    _
  $region9: #{_rope_forward.1} parent=0 // pred_fallthru
    _
  // Predicated region
  $region10: #{_rope_forward.1} parent=0 // pred_check
    _
  $region11: #{_rope_forward.1} parent=0 // pred_check_branch
    %14 = sbr.rel (0) target = $region13
  $region12: #{_rope_forward.1} parent=0 // pred_region
    _
  $region13: #{_rope_forward.1} parent=0 // pred_fallthru
    _
  // Predicated region
  $region14: #{_rope_forward.1} parent=0 // pred_check
    _
  $region15: #{_rope_forward.1} parent=0 // pred_check_branch
    %16 = sbr.rel (0) target = $region17
  $region16: #{_rope_forward.1} parent=0 // pred_region
    _
  $region17: #{_rope_forward.1} parent=0 // pred_fallthru
    _
  %v17 = vld [vmem:[%s0] sm:$0x3f]
  %v18 = vld [vmem:[%s0 + $0x8] sm:$0x3f]
  %v19 = vld [vmem:[%s0 + $0x10] sm:$0x3f]
  %v20 = vld [vmem:[%s0 + $0x18] sm:$0x3f]
  %v21 = vld [vmem:[%s0 + $0x20] sm:$0x3f]
  %v22 = vld [vmem:[%s0 + $0x28] sm:$0x3f]
  %v23 = vld [vmem:[%s0 + $0x30] sm:$0x3f]
  %v24 = vld [vmem:[%s0 + $0x38] sm:$0x3f]
  %v25 = vld [vmem:[%s1] sm:$0xff]
  %v26 = vld [vmem:[%s2] sm:$0xff]
  %v27 = vld [vmem:[%s3] sm:$0xff]
  %28 = vrot.lane.b32.xlu0 %v17, 127
  %v29 = vpop.permute.xlu0 %28
  %30 = vrot.lane.b32.xlu0 %v18, 127
  %v31 = vpop.permute.xlu0 %30
  %32 = vrot.lane.b32.xlu0 %v19, 127
  %v33 = vpop.permute.xlu0 %32
  %34 = vrot.lane.b32.xlu0 %v20, 127
  %v35 = vpop.permute.xlu0 %34
  %36 = vrot.lane.b32.xlu0 %v21, 127
  %v37 = vpop.permute.xlu0 %36
  %38 = vrot.lane.b32.xlu0 %v22, 127
  %v39 = vpop.permute.xlu0 %38
  %40 = vrot.lane.b32.xlu0 %v23, 127
  %v41 = vpop.permute.xlu0 %40
  %42 = vrot.lane.b32.xlu0 %v24, 127
  %v43 = vpop.permute.xlu0 %42
  %v44 = vlaneseq
  %v45 = vand.u32 %v44, 127
  %vm46 = vcmp.lt.s32.totalorder %v45, 127
  %v47 = vsel %vm46, %v41, %v43
  %v48 = vsel %vm46, %v39, %v41
  %v49 = vsel %vm46, %v37, %v39
  %v50 = vsel %vm46, %v35, %v37
  %v51 = vsel %vm46, %v33, %v35
  %v52 = vsel %vm46, %v31, %v33
  %v53 = vsel %vm46, %v29, %v31
  %v54 = vsel %vm46, %v43, %v29
  %55 = vrot.lane.b32.xlu0 %v17, 1
  %v56 = vpop.permute.xlu0 %55
  %57 = vrot.lane.b32.xlu0 %v18, 1
  %v58 = vpop.permute.xlu0 %57
  %59 = vrot.lane.b32.xlu0 %v19, 1
  %v60 = vpop.permute.xlu0 %59
  %61 = vrot.lane.b32.xlu0 %v20, 1
  %v62 = vpop.permute.xlu0 %61
  %63 = vrot.lane.b32.xlu0 %v21, 1
  %v64 = vpop.permute.xlu0 %63
  %65 = vrot.lane.b32.xlu0 %v22, 1
  %v66 = vpop.permute.xlu0 %65
  %67 = vrot.lane.b32.xlu0 %v23, 1
  %v68 = vpop.permute.xlu0 %67
  %69 = vrot.lane.b32.xlu0 %v24, 1
  %v70 = vpop.permute.xlu0 %69
  %vm71 = vcmp.lt.s32.totalorder %v45, 1
  %v72 = vsel %vm71, %v68, %v70
  %v73 = vsel %vm71, %v66, %v68
  %v74 = vsel %vm71, %v64, %v66
  %v75 = vsel %vm71, %v62, %v64
  %v76 = vsel %vm71, %v60, %v62
  %v77 = vsel %vm71, %v58, %v60
  %v78 = vsel %vm71, %v56, %v58
  %v79 = vsel %vm71, %v70, %v56
  %v81 = vlaneseq
  %v82 = vshrl.u32 %v81, 7
  %v83 = vsub.s32 0, %v82
  %v84 = vrot.slane %v25, %v83
  %v85 = vlaneseq
  %v86 = vshrl.u32 %v85, 7
  %v87 = vsub.s32 1, %v86
  %v88 = vrot.slane %v25, %v87
  %v89 = vlaneseq
  %v90 = vshrl.u32 %v89, 7
  %v91 = vsub.s32 2, %v90
  %v92 = vrot.slane %v25, %v91
  %v93 = vlaneseq
  %v94 = vshrl.u32 %v93, 7
  %v95 = vsub.s32 3, %v94
  %v96 = vrot.slane %v25, %v95
  %v97 = vlaneseq
  %v98 = vshrl.u32 %v97, 7
  %v99 = vsub.s32 4, %v98
  %v100 = vrot.slane %v25, %v99
  %v101 = vlaneseq
  %v102 = vshrl.u32 %v101, 7
  %v103 = vsub.s32 5, %v102
  %v104 = vrot.slane %v25, %v103
  %v105 = vlaneseq
  %v106 = vshrl.u32 %v105, 7
  %v107 = vsub.s32 6, %v106
  %v108 = vrot.slane %v25, %v107
  %v109 = vlaneseq
  %v110 = vshrl.u32 %v109, 7
  %v111 = vsub.s32 7, %v110
  %v112 = vrot.slane %v25, %v111
  %v121 = vmul.f32 %v17, %v84
  %v122 = vmul.f32 %v18, %v88
  %v123 = vmul.f32 %v19, %v92
  %v124 = vmul.f32 %v20, %v96
  %v125 = vmul.f32 %v21, %v100
  %v126 = vmul.f32 %v22, %v104
  %v127 = vmul.f32 %v23, %v108
  %v128 = vmul.f32 %v24, %v112
  %v130 = vlaneseq
  %v131 = vshrl.u32 %v130, 7
  %v132 = vsub.s32 0, %v131
  %v133 = vrot.slane %v26, %v132
  %v134 = vlaneseq
  %v135 = vshrl.u32 %v134, 7
  %v136 = vsub.s32 1, %v135
  %v137 = vrot.slane %v26, %v136
  %v138 = vlaneseq
  %v139 = vshrl.u32 %v138, 7
  %v140 = vsub.s32 2, %v139
  %v141 = vrot.slane %v26, %v140
  %v142 = vlaneseq
  %v143 = vshrl.u32 %v142, 7
  %v144 = vsub.s32 3, %v143
  %v145 = vrot.slane %v26, %v144
  %v146 = vlaneseq
  %v147 = vshrl.u32 %v146, 7
  %v148 = vsub.s32 4, %v147
  %v149 = vrot.slane %v26, %v148
  %v150 = vlaneseq
  %v151 = vshrl.u32 %v150, 7
  %v152 = vsub.s32 5, %v151
  %v153 = vrot.slane %v26, %v152
  %v154 = vlaneseq
  %v155 = vshrl.u32 %v154, 7
  %v156 = vsub.s32 6, %v155
  %v157 = vrot.slane %v26, %v156
  %v158 = vlaneseq
  %v159 = vshrl.u32 %v158, 7
  %v160 = vsub.s32 7, %v159
  %v161 = vrot.slane %v26, %v160
  %v170 = vmul.f32 %v53, %v133
  %v171 = vmul.f32 %v52, %v137
  %v172 = vmul.f32 %v51, %v141
  %v173 = vmul.f32 %v50, %v145
  %v174 = vmul.f32 %v49, %v149
  %v175 = vmul.f32 %v48, %v153
  %v176 = vmul.f32 %v47, %v157
  %v177 = vmul.f32 %v54, %v161
  %v178 = vadd.f32 %v121, %v170
  %v179 = vadd.f32 %v122, %v171
  %v180 = vadd.f32 %v123, %v172
  %v181 = vadd.f32 %v124, %v173
  %v182 = vadd.f32 %v125, %v174
  %v183 = vadd.f32 %v126, %v175
  %v184 = vadd.f32 %v127, %v176
  %v185 = vadd.f32 %v128, %v177
  %v187 = vlaneseq
  %v188 = vshrl.u32 %v187, 7
  %v189 = vsub.s32 0, %v188
  %v190 = vrot.slane %v27, %v189
  %v191 = vlaneseq
  %v192 = vshrl.u32 %v191, 7
  %v193 = vsub.s32 1, %v192
  %v194 = vrot.slane %v27, %v193
  %v195 = vlaneseq
  %v196 = vshrl.u32 %v195, 7
  %v197 = vsub.s32 2, %v196
  %v198 = vrot.slane %v27, %v197
  %v199 = vlaneseq
  %v200 = vshrl.u32 %v199, 7
  %v201 = vsub.s32 3, %v200
  %v202 = vrot.slane %v27, %v201
  %v203 = vlaneseq
  %v204 = vshrl.u32 %v203, 7
  %v205 = vsub.s32 4, %v204
  %v206 = vrot.slane %v27, %v205
  %v207 = vlaneseq
  %v208 = vshrl.u32 %v207, 7
  %v209 = vsub.s32 5, %v208
  %v210 = vrot.slane %v27, %v209
  %v211 = vlaneseq
  %v212 = vshrl.u32 %v211, 7
  %v213 = vsub.s32 6, %v212
  %v214 = vrot.slane %v27, %v213
  %v215 = vlaneseq
  %v216 = vshrl.u32 %v215, 7
  %v217 = vsub.s32 7, %v216
  %v218 = vrot.slane %v27, %v217
  %v227 = vmul.f32 %v79, %v190
  %v228 = vmul.f32 %v78, %v194
  %v229 = vmul.f32 %v77, %v198
  %v230 = vmul.f32 %v76, %v202
  %v231 = vmul.f32 %v75, %v206
  %v232 = vmul.f32 %v74, %v210
  %v233 = vmul.f32 %v73, %v214
  %v234 = vmul.f32 %v72, %v218
  %v235 = vadd.f32 %v178, %v227
  %v236 = vadd.f32 %v179, %v228
  %v237 = vadd.f32 %v180, %v229
  %v238 = vadd.f32 %v181, %v230
  %v239 = vadd.f32 %v182, %v231
  %v240 = vadd.f32 %v183, %v232
  %v241 = vadd.f32 %v184, %v233
  %v242 = vadd.f32 %v185, %v234
  %243 = vst [vmem:[%s4] sm:$0x3f] %v235
  %244 = vst [vmem:[%s4 + $0x8] sm:$0x3f] %v236
  %245 = vst [vmem:[%s4 + $0x10] sm:$0x3f] %v237
  %246 = vst [vmem:[%s4 + $0x18] sm:$0x3f] %v238
  %247 = vst [vmem:[%s4 + $0x20] sm:$0x3f] %v239
  %248 = vst [vmem:[%s4 + $0x28] sm:$0x3f] %v240
  %249 = vst [vmem:[%s4 + $0x30] sm:$0x3f] %v241
  %250 = vst [vmem:[%s4 + $0x38] sm:$0x3f] %v242
  // Predicated region
  $region18: #{_rope_forward.1} parent=0 // pred_check
    _
  $region19: #{_rope_forward.1} parent=0 // pred_check_branch
    %252 = sbr.rel (0) target = $region21
  $region20: #{_rope_forward.1} parent=0 // pred_region
    _
  $region21: #{_rope_forward.1} parent=0 // pred_fallthru
    _
  // Predicated region
  $region22: #{_rope_forward.1} parent=0 // pred_check
    _
  $region23: #{_rope_forward.1} parent=0 // pred_check_branch
    %254 = sbr.rel (0) target = $region25
  $region24: #{_rope_forward.1} parent=0 // pred_region
    _
  $region25: #{_rope_forward.1} parent=0 // pred_fallthru
    _

</llo_original>
